<compile_context>
chip_gen: v5e
topology: v5e:2x2
jax: 0.10.0
libtpu: 0.0.40
codegen_flags: <defaults>
</compile_context>

<pallas_src>
import math
from functools import partial

import jax
import jax.numpy as jnp
from jax.experimental import pallas as pl
from jax.experimental.pallas import tpu as pltpu

# Keep XLA reference matmuls at f32 precision so it matches the MXU f32 path.
jax.config.update("jax_default_matmul_precision", "highest")

NEG_INF = -1e9          # matches torch masked_fill(-1000000000.0)
LN_EPS = 1e-5           # torch.nn.LayerNorm default

_CPARAMS = pltpu.CompilerParams(dimension_semantics=("parallel",))


# ===========================================================================
# Pallas kernels
# ===========================================================================
def _linear_kernel(x_ref, w_ref, b_ref, o_ref, *, relu):
    y = jnp.dot(x_ref[...], w_ref[...], preferred_element_type=jnp.float32)
    y = y + b_ref[...]
    if relu:
        y = jnp.maximum(y, 0.0)
    o_ref[...] = y.astype(o_ref.dtype)


def _linear_res_ln_kernel(x_ref, w_ref, b_ref, res_ref, g_ref, be_ref, o_ref):
    # LayerNorm( x @ W + b + residual )
    y = jnp.dot(x_ref[...], w_ref[...], preferred_element_type=jnp.float32)
    y = y + b_ref[...] + res_ref[...]
    mu = jnp.mean(y, axis=-1, keepdims=True)
    var = jnp.mean(jnp.square(y - mu), axis=-1, keepdims=True)
    y = (y - mu) * jax.lax.rsqrt(var + LN_EPS)
    o_ref[...] = (y * g_ref[...] + be_ref[...]).astype(o_ref.dtype)


def _ffn_res_ln_kernel(x_ref, w1_ref, b1_ref, w2_ref, b2_ref, g_ref, be_ref, o_ref):
    # LayerNorm( relu(x W1 + b1) W2 + b2 + x )
    x = x_ref[...]
    h = jnp.dot(x, w1_ref[...], preferred_element_type=jnp.float32) + b1_ref[...]
    h = jnp.maximum(h, 0.0)
    y = jnp.dot(h, w2_ref[...], preferred_element_type=jnp.float32) + b2_ref[...]
    y = y + x
    mu = jnp.mean(y, axis=-1, keepdims=True)
    var = jnp.mean(jnp.square(y - mu), axis=-1, keepdims=True)
    y = (y - mu) * jax.lax.rsqrt(var + LN_EPS)
    o_ref[...] = (y * g_ref[...] + be_ref[...]).astype(o_ref.dtype)


def _attention_kernel(q_ref, k_ref, v_ref, m_ref, o_ref, *, scale):
    # One (batch*head) per grid step: softmax(QK^T * scale, masked) @ V
    q = q_ref[0]                                    # (Lq, Dk)
    k = k_ref[0]                                    # (Lk, Dk)
    v = v_ref[0]                                    # (Lk, Dv)
    s = jax.lax.dot_general(q, k, (((1,), (1,)), ((), ())),
                            preferred_element_type=jnp.float32) * scale
    s = jnp.where(m_ref[0] > 0.5, NEG_INF, s)       # masked_fill semantics
    s = s - jnp.max(s, axis=-1, keepdims=True)
    p = jnp.exp(s)
    p = p / jnp.sum(p, axis=-1, keepdims=True)
    o_ref[0] = jnp.dot(p, v, preferred_element_type=jnp.float32).astype(o_ref.dtype)


# ===========================================================================
# pallas_call wrappers
# ===========================================================================
def _row_tile(m, cap=256):
    return m if m <= cap else cap


def pallas_linear(x, w, b, relu=False):
    lead = x.shape[:-1]
    K = x.shape[-1]
    N = w.shape[1]
    M = int(math.prod(lead)) if lead else 1
    x2 = x.reshape(M, K)
    tm = _row_tile(M)
    out = pl.pallas_call(
        partial(_linear_kernel, relu=relu),
        out_shape=jax.ShapeDtypeStruct((M, N), x.dtype),
        grid=(pl.cdiv(M, tm),),
        in_specs=[
            pl.BlockSpec((tm, K), lambda i: (i, 0)),   # activations: streamed
            pl.BlockSpec((K, N), lambda i: (0, 0)),    # weight: resident
            pl.BlockSpec((1, N), lambda i: (0, 0)),    # bias: resident
        ],
        out_specs=pl.BlockSpec((tm, N), lambda i: (i, 0)),
        compiler_params=_CPARAMS,
    )(x2, w, b.reshape(1, N))
    return out.reshape(*lead, N)


def pallas_linear_res_ln(x, w, b, residual, gamma, beta):
    lead = x.shape[:-1]
    K = x.shape[-1]
    N = w.shape[1]
    M = int(math.prod(lead)) if lead else 1
    x2 = x.reshape(M, K)
    r2 = residual.reshape(M, N)
    tm = _row_tile(M)
    out = pl.pallas_call(
        _linear_res_ln_kernel,
        out_shape=jax.ShapeDtypeStruct((M, N), x.dtype),
        grid=(pl.cdiv(M, tm),),
        in_specs=[
            pl.BlockSpec((tm, K), lambda i: (i, 0)),
            pl.BlockSpec((K, N), lambda i: (0, 0)),
            pl.BlockSpec((1, N), lambda i: (0, 0)),
            pl.BlockSpec((tm, N), lambda i: (i, 0)),
            pl.BlockSpec((1, N), lambda i: (0, 0)),
            pl.BlockSpec((1, N), lambda i: (0, 0)),
        ],
        out_specs=pl.BlockSpec((tm, N), lambda i: (i, 0)),
        compiler_params=_CPARAMS,
    )(x2, w, b.reshape(1, N), r2, gamma.reshape(1, N), beta.reshape(1, N))
    return out.reshape(*lead, N)


def pallas_ffn_res_ln(x, w1, b1, w2, b2, gamma, beta):
    lead = x.shape[:-1]
    D = x.shape[-1]
    F = w1.shape[1]
    M = int(math.prod(lead)) if lead else 1
    x2 = x.reshape(M, D)
    tm = _row_tile(M)
    out = pl.pallas_call(
        _ffn_res_ln_kernel,
        out_shape=jax.ShapeDtypeStruct((M, D), x.dtype),
        grid=(pl.cdiv(M, tm),),
        in_specs=[
            pl.BlockSpec((tm, D), lambda i: (i, 0)),
            pl.BlockSpec((D, F), lambda i: (0, 0)),
            pl.BlockSpec((1, F), lambda i: (0, 0)),
            pl.BlockSpec((F, D), lambda i: (0, 0)),
            pl.BlockSpec((1, D), lambda i: (0, 0)),
            pl.BlockSpec((1, D), lambda i: (0, 0)),
            pl.BlockSpec((1, D), lambda i: (0, 0)),
        ],
        out_specs=pl.BlockSpec((tm, D), lambda i: (i, 0)),
        compiler_params=_CPARAMS,
    )(x2, w1, b1.reshape(1, F), w2, b2.reshape(1, D),
      gamma.reshape(1, D), beta.reshape(1, D))
    return out.reshape(*lead, D)


def pallas_attention(q, k, v, mask=None):
    """q: (G, Lq, Dk), k: (G, Lk, Dk), v: (G, Lk, Dv), mask: (Lq, Lk) bool or None."""
    G, Lq, Dk = q.shape
    Lk, Dv = k.shape[1], v.shape[2]
    if mask is None:
        m = jnp.zeros((1, Lq, Lk), jnp.float32)
    else:
        m = mask.astype(jnp.float32).reshape(1, Lq, Lk)
    scale = 1.0 / math.sqrt(Dk)
    return pl.pallas_call(
        partial(_attention_kernel, scale=scale),
        out_shape=jax.ShapeDtypeStruct((G, Lq, Dv), q.dtype),
        grid=(G,),
        in_specs=[
            pl.BlockSpec((1, Lq, Dk), lambda g: (g, 0, 0)),
            pl.BlockSpec((1, Lk, Dk), lambda g: (g, 0, 0)),
            pl.BlockSpec((1, Lk, Dv), lambda g: (g, 0, 0)),
            pl.BlockSpec((1, Lq, Lk), lambda g: (0, 0, 0)),   # mask: resident
        ],
        out_specs=pl.BlockSpec((1, Lq, Dv), lambda g: (g, 0, 0)),
        compiler_params=_CPARAMS,
    )(q, k, v, m)


# ===========================================================================
# Model composition (kernels wired per the PyTorch module structure)
# ===========================================================================
def causal_mask(L):
    # torch.triu(ones(L,L)).t() == 0  -> True where key index > query index
    return jnp.arange(L)[None, :] > jnp.arange(L)[:, None]


def multi_head_attention(p, query, key, value, num_head, mask=None):
    B, Lq, Dm = query.shape
    Lk = key.shape[1]
    dk = Dm // num_head
    residual = query
    q = pallas_linear(query, p["wq"], p["bq"])
    k = pallas_linear(key, p["wk"], p["bk"])
    v = pallas_linear(value, p["wv"], p["bv"])

    def split_heads(t, L):
        return t.reshape(B, L, num_head, dk).transpose(0, 2, 1, 3).reshape(B * num_head, L, dk)

    oh = pallas_attention(split_heads(q, Lq), split_heads(k, Lk), split_heads(v, Lk), mask)
    o = oh.reshape(B, num_head, Lq, dk).transpose(0, 2, 1, 3).reshape(B, Lq, Dm)
    return pallas_linear_res_ln(o, p["wo"], p["bo"], residual, p["ln_g"], p["ln_b"])


def feed_forward(p, x):
    return pallas_ffn_res_ln(x, p["w1"], p["b1"], p["w2"], p["b2"], p["ln_g"], p["ln_b"])


def encoder_forward(layers, x, num_head):
    # MlTransformer sets encoder.src_emb = None and get_attn_pad_mask = None,
    # so there is no embedding, no PE and no pad mask here.
    for layer in layers:
        a = multi_head_attention(layer["attn"], x, x, x, num_head, mask=None)
        x = feed_forward(layer["ffn"], a)
    return x


def decoder_forward(layers, x, enc_out, num_head):
    pos_mask = causal_mask(x.shape[1])
    for layer in layers:
        x = multi_head_attention(layer["self_attn"], x, x, x, num_head, mask=pos_mask)
        x = multi_head_attention(layer["cross_attn"], x, enc_out, enc_out, num_head, mask=None)
        x = feed_forward(layer["ffn"], x)
    return x


def ml_transformer_forward(params, x_hist, x_future, y_prevs, x_grid, is_train=False):
    del is_train  # prob = 0.0 -> teacher forcing branch never fires
    B, S, _ = x_hist.shape
    n_grids = x_grid.shape[2]
    num_head = params["num_head"]

    # grid attention: q = grid_att_fc(x_hist)[:, :, None, :]; k = v = x_grid
    q = pallas_linear(x_hist, params["grid_att_fc"]["w"], params["grid_att_fc"]["b"])
    G = B * S
    kv = x_grid.reshape(G, n_grids, x_grid.shape[-1])
    grid_att = pallas_attention(q.reshape(G, 1, q.shape[-1]), kv, kv, None).reshape(B, S, -1)

    enc_in = jnp.concatenate([x_hist, grid_att], axis=-1)
    enc_in = pallas_linear(enc_in, params["enc_input_fc"]["w"], params["enc_input_fc"]["b"])
    enc_out = encoder_forward(params["encoder"], enc_in, num_head)

    # autoregressive decode (regression branch)
    ys = y_prevs[:, 0:1]
    out = None
    for i in range(x_future.shape[1]):
        x = jnp.concatenate([x_future[:, : i + 1], ys], axis=-1)
        x = pallas_linear(x, params["dec_input_fc"]["w"], params["dec_input_fc"]["b"])
        x = decoder_forward(params["decoder"], x, enc_out, num_head)
        out = pallas_linear(x, params["final_fc"]["w"], params["final_fc"]["b"])
        ys = jnp.concatenate([y_prevs[:, 0:1], out], axis=1)
    return ys[:, 1:]


# ===========================================================================
# Pure-JAX reference (mirrors the PyTorch forward) for verification
# ===========================================================================
def _ref_linear(x, w, b):
    return jnp.matmul(x, w) + b


def _ref_attention(q, k, v, mask=None):
    dk = q.shape[-1]
    s = jnp.matmul(q, jnp.swapaxes(k, -1, -2)) / math.sqrt(dk)
    if mask is not None:
        s = jnp.where(mask, NEG_INF, s)
    return jnp.matmul(jax.nn.softmax(s, axis=-1), v)


def _ref_layer_norm(x, g, b):
    mu = jnp.mean(x, axis=-1, keepdims=True)
    var = jnp.mean(jnp.square(x - mu), axis=-1, keepdims=True)
    return (x - mu) / jnp.sqrt(var + LN_EPS) * g + b


def _ref_mha(p, query, key, value, num_head, mask=None):
    B, Lq, Dm = query.shape
    Lk = key.shape[1]
    dk = Dm // num_head
    residual = query
    q = _ref_linear(query, p["wq"], p["bq"]).reshape(B, Lq, num_head, dk).transpose(0, 2, 1, 3)
    k = _ref_linear(key, p["wk"], p["bk"]).reshape(B, Lk, num_head, dk).transpose(0, 2, 1, 3)
    v = _ref_linear(value, p["wv"], p["bv"]).reshape(B, Lk, num_head, dk).transpose(0, 2, 1, 3)
    m = None if mask is None else mask[None, None]
    o = _ref_attention(q, k, v, m).transpose(0, 2, 1, 3).reshape(B, Lq, Dm)
    o = _ref_linear(o, p["wo"], p["bo"])
    return _ref_layer_norm(o + residual, p["ln_g"], p["ln_b"])


def _ref_ffn(p, x):
    h = jnp.maximum(_ref_linear(x, p["w1"], p["b1"]), 0.0)
    y = _ref_linear(h, p["w2"], p["b2"])
    return _ref_layer_norm(y + x, p["ln_g"], p["ln_b"])


def _ref_forward(params, x_hist, x_future, y_prevs, x_grid):
    num_head = params["num_head"]
    q = _ref_linear(x_hist, params["grid_att_fc"]["w"], params["grid_att_fc"]["b"])[:, :, None, :]
    grid_att = _ref_attention(q, x_grid, x_grid, None)[:, :, 0, :]
    x = _ref_linear(jnp.concatenate([x_hist, grid_att], axis=-1),
                    params["enc_input_fc"]["w"], params["enc_input_fc"]["b"])
    for layer in params["encoder"]:
        x = _ref_ffn(layer["ffn"], _ref_mha(layer["attn"], x, x, x, num_head, None))
    enc_out = x

    ys = y_prevs[:, 0:1]
    out = None
    for i in range(x_future.shape[1]):
        d = jnp.concatenate([x_future[:, : i + 1], ys], axis=-1)
        d = _ref_linear(d, params["dec_input_fc"]["w"], params["dec_input_fc"]["b"])
        pos_mask = causal_mask(d.shape[1])
        for layer in params["decoder"]:
            d = _ref_mha(layer["self_attn"], d, d, d, num_head, pos_mask)
            d = _ref_mha(layer["cross_attn"], d, enc_out, enc_out, num_head, None)
            d = _ref_ffn(layer["ffn"], d)
        out = _ref_linear(d, params["final_fc"]["w"], params["final_fc"]["b"])
        ys = jnp.concatenate([y_prevs[:, 0:1], out], axis=1)
    return ys[:, 1:]


# ===========================================================================
# Parameter init
# ===========================================================================
def _init_linear(key, fan_in, fan_out):
    kw, kb = jax.random.split(key)
    return {
        "w": jax.random.normal(kw, (fan_in, fan_out), jnp.float32) / math.sqrt(fan_in),
        "b": jax.random.normal(kb, (fan_out,), jnp.float32) * 0.02,
    }


def _init_mha(key, d_model):
    ks = jax.random.split(key, 4)
    lq, lk, lv, lo = (_init_linear(k, d_model, d_model) for k in ks)
    return {"wq": lq["w"], "bq": lq["b"], "wk": lk["w"], "bk": lk["b"],
            "wv": lv["w"], "bv": lv["b"], "wo": lo["w"], "bo": lo["b"],
            "ln_g": jnp.ones((d_model,), jnp.float32),
            "ln_b": jnp.zeros((d_model,), jnp.float32)}


def _init_ffn(key, d_model, d_ff):
    k1, k2 = jax.random.split(key)
    l1, l2 = _init_linear(k1, d_model, d_ff), _init_linear(k2, d_ff, d_model)
    return {"w1": l1["w"], "b1": l1["b"], "w2": l2["w"], "b2": l2["b"],
            "ln_g": jnp.ones((d_model,), jnp.float32),
            "ln_b": jnp.zeros((d_model,), jnp.float32)}


def init_params(key, *, enc_input_dim, dec_input_dim, out_dim, num_head, d_model, d_ff, N):
    keys = iter(jax.random.split(key, 4 + 5 * N))
    return {
        "num_head": num_head,
        "grid_att_fc": _init_linear(next(keys), enc_input_dim, out_dim),
        "enc_input_fc": _init_linear(next(keys), enc_input_dim + out_dim, d_model),
        "dec_input_fc": _init_linear(next(keys), dec_input_dim + out_dim, d_model),
        "final_fc": _init_linear(next(keys), d_model, out_dim),
        "encoder": [{"attn": _init_mha(next(keys), d_model),
                     "ffn": _init_ffn(next(keys), d_model, d_ff)} for _ in range(N)],
        "decoder": [{"self_attn": _init_mha(next(keys), d_model),
                     "cross_attn": _init_mha(next(keys), d_model),
                     "ffn": _init_ffn(next(keys), d_model, d_ff)} for _ in range(N)],
    }


# ===========================================================================
if __name__ == "__main__":
    key = jax.random.PRNGKey(0)
    B, S, Tf = 2, 8, 4
    enc_input_dim, dec_input_dim, out_dim = 16, 8, 8
    num_head, d_model, d_ff, N = 4, 32, 64, 2
    n_grids = 4   # x_grid feature dim must equal out_dim for the grid attention to type-check

    k_params, k_hist, k_fut, k_yp, k_grid = jax.random.split(key, 5)
    params = init_params(k_params, enc_input_dim=enc_input_dim, dec_input_dim=dec_input_dim,
                         out_dim=out_dim, num_head=num_head, d_model=d_model, d_ff=d_ff, N=N)

    x_hist = jax.random.normal(k_hist, (B, S, enc_input_dim), jnp.float32)
    x_future = jax.random.normal(k_fut, (B, Tf, dec_input_dim), jnp.float32)
    y_prevs = jax.random.normal(k_yp, (B, Tf, out_dim), jnp.float32)
    x_grid = jax.random.normal(k_grid, (B, S, n_grids, out_dim), jnp.float32)

    out = ml_transformer_forward(params, x_hist, x_future, y_prevs, x_grid, is_train=False)
    out = jax.block_until_ready(out)

    ref = jax.block_until_ready(_ref_forward(params, x_hist, x_future, y_prevs, x_grid))

    assert out.shape == (B, Tf, out_dim)
    assert jnp.allclose(out, ref, atol=1e-3, rtol=1e-3), float(jnp.max(jnp.abs(out - ref)))

    print("KERNEL_OK")
</pallas_src>

<mosaic_0001>
module attributes {stable_mosaic.version = 11 : i64} {
  func.func @_linear_kernel(%arg0: i32, %arg1: memref<16x16xf32, #tpu.memory_space<vmem>>, %arg2: memref<16x8xf32, #tpu.memory_space<vmem>>, %arg3: memref<1x8xf32, #tpu.memory_space<vmem>>, %arg4: memref<16x8xf32, #tpu.memory_space<vmem>>) attributes {dimension_semantics = [#tpu.dimension_semantics<parallel>], iteration_bounds = array<i64: 1>, scalar_prefetch = 0 : i64, scratch_operands = 0 : i64, tpu.core_type = #tpu.core_type<tc>, window_params = [{transform_indices = @transform_0, window_bounds = array<i64: 16, 16>}, {pipeline_mode = #tpu.pipeline_mode<synchronous>, transform_indices = @transform_1, window_bounds = array<i64: 16, 8>}, {pipeline_mode = #tpu.pipeline_mode<synchronous>, transform_indices = @transform_2, window_bounds = array<i64: 1, 8>}, {transform_indices = @transform_3, window_bounds = array<i64: 16, 8>}]} {
    %c0 = arith.constant 0 : index
    %c0_0 = arith.constant 0 : index
    %0 = vector.load %arg1[%c0, %c0_0] : memref<16x16xf32, #tpu.memory_space<vmem>>, vector<16x16xf32>
    %c0_1 = arith.constant 0 : index
    %c0_2 = arith.constant 0 : index
    %1 = vector.load %arg2[%c0_1, %c0_2] : memref<16x8xf32, #tpu.memory_space<vmem>>, vector<16x8xf32>
    %cst = arith.constant dense<0.000000e+00> : vector<16x8xf32>
    %2 = tpu.matmul %0, %1, %cst {dimension_numbers = #tpu.dot_dimension_numbers<[1], [0], [0], [1], [0, 0, 1, 1], [], []>, precision = #tpu.contract_precision<fp32>} : vector<16x16xf32>, vector<16x8xf32>, vector<16x8xf32> -> vector<16x8xf32>
    %c0_3 = arith.constant 0 : index
    %c0_4 = arith.constant 0 : index
    %3 = vector.load %arg3[%c0_3, %c0_4] : memref<1x8xf32, #tpu.memory_space<vmem>>, vector<1x8xf32>
    %4 = vector.broadcast %3 : vector<1x8xf32> to vector<16x8xf32>
    %5 = arith.addf %2, %4 : vector<16x8xf32>
    %c0_5 = arith.constant 0 : index
    %c0_6 = arith.constant 0 : index
    %6 = vector.load %arg4[%c0_5, %c0_6] : memref<16x8xf32, #tpu.memory_space<vmem>>, vector<16x8xf32>
    tpu.vector_store %arg4[%c0_5, %c0_6], %5 {strides = array<i32>} : memref<16x8xf32, #tpu.memory_space<vmem>>, vector<16x8xf32>,
    return
  }
  func.func @transform_0(%arg0: i32) -> (i32, i32) {
    %c0_i32 = arith.constant 0 : i32
    %c0_i32_0 = arith.constant 0 : i32
    return %arg0, %c0_i32 : i32, i32
  }
  func.func @transform_1(%arg0: i32) -> (i32, i32) {
    %c0_i32 = arith.constant 0 : i32
    %c0_i32_0 = arith.constant 0 : i32
    %c0_i32_1 = arith.constant 0 : i32
    return %c0_i32, %c0_i32_0 : i32, i32
  }
  func.func @transform_2(%arg0: i32) -> (i32, i32) {
    %c0_i32 = arith.constant 0 : i32
    %c0_i32_0 = arith.constant 0 : i32
    %c0_i32_1 = arith.constant 0 : i32
    return %c0_i32, %c0_i32_0 : i32, i32
  }
  func.func @transform_3(%arg0: i32) -> (i32, i32) {
    %c0_i32 = arith.constant 0 : i32
    %c0_i32_0 = arith.constant 0 : i32
    return %arg0, %c0_i32 : i32, i32
  }
}

</mosaic_0001>

<llo_original>
// kernel: tpu_custom_call.1
$region0: #{tpu_custom_call.1}
  #allocation0 [shape = 'u32[]', space=smem, size = 0x4, offset = 0x4, fixed_abs, tag = 'smem constant byte address 0x4 - core index']
  #allocation1 [shape = 'u32[72,128]{1,0:T(1,128)}', space=vmem, size = 0x9000, scoped, tag = 'internal scratch']
  %s0 = inlined_call_operand.vmem [shape: f32[16,16], index: 0, kind: input, shape index: {}]
  %s1 = inlined_call_operand.vmem [shape: f32[16,8], index: 1, kind: input, shape index: {}]
  %s2 = inlined_call_operand.vmem [shape: f32[1,8], index: 2, kind: input, shape index: {}]
  %s3 = inlined_call_operand.vmem [shape: f32[16,8], index: 3, kind: output, shape index: {}]
  %s4 = sld [smem:[#allocation0]]
  $region22: #{tpu_custom_call.1} parent=0
    _
  %s6 = ssub.s32 1, %s4
  %s7 = scalar_select 0, %s6, %s4
  // Predicated region
  $region2: #{tpu_custom_call.1} parent=0 // pred_check
    _
  $region3: #{tpu_custom_call.1} parent=0 // pred_check_branch
    %9 = sbr.rel (0) target = $region5
  $region4: #{tpu_custom_call.1} parent=0 // pred_region
    _
  $region5: #{tpu_custom_call.1} parent=0 // pred_fallthru
    _
  // Predicated region
  $region6: #{tpu_custom_call.1} parent=0 // pred_check
    _
  $region7: #{tpu_custom_call.1} parent=0 // pred_check_branch
    %11 = sbr.rel (0) target = $region9
  $region8: #{tpu_custom_call.1} parent=0 // pred_region
    _
  $region9: #{tpu_custom_call.1} parent=0 // pred_fallthru
    _
  // Predicated region
  $region10: #{tpu_custom_call.1} parent=0 // pred_check
    _
  $region11: #{tpu_custom_call.1} parent=0 // pred_check_branch
    %13 = sbr.rel (0) target = $region13
  $region12: #{tpu_custom_call.1} parent=0 // pred_region
    _
  $region13: #{tpu_custom_call.1} parent=0 // pred_fallthru
    _
  %v14 = vld [vmem:[%s0] sm:$0xff]
  %v15 = vld [vmem:[%s0 + $0x8] sm:$0xff]
  %v16 = vld [vmem:[%s1] sm:$0xff]
  %v17 = vld [vmem:[%s1 + $0x8] sm:$0xff]
  %v18 = vld [vmem:[%s2] sm:$0x1]
  %v20 = vperm.slane %v18, 0
  %vm22 = vcmask 130048
  %v24 = vsel %vm22, %v14, 0
  %v27 = vsel %vm22, %v15, 0
  %29 = vmatpush.msra.mxu0 0.0
  %30 = vmatpush.msra.mxu0 0.0
  %31 = vmatpush.msra.mxu0 0.0
  %32 = vmatpush.msra.mxu0 0.0
  %33 = vmatpush.msra.mxu0 0.0
  %34 = vmatpush.msra.mxu0 0.0
  %35 = vmatpush.msra.mxu0 0.0
  %36 = vmatpush.msra.mxu0 0.0
  %37 = vmatpush.msra.mxu0 0.0
  %38 = vmatpush.msra.mxu0 0.0
  %39 = vmatpush.msra.mxu0 0.0
  %40 = vmatpush.msra.mxu0 0.0
  %41 = vmatpush.msra.mxu0 0.0
  %42 = vmatpush.msra.mxu0 0.0
  %v43 = vand.u32 %v17, 4294901760
  %44 = vmatpush.msra.mxu0 %v43
  %v45 = vand.u32 %v16, 4294901760
  %46 = vmatpush.msra.mxu0 %v45
  %v47 = vand.u32 %v24, 4294901760
  %v48 = vsub.f32 %v24, %v47
  %v49 = vand.u32 %v48, 4294901760
  %v50 = vsub.f32 %v48, %v49
  %v51 = vand.u32 %v50, 4294901760
  %52 = vmatmul.f32.gmra.mxu0 %v51
  %v53 = vpop.f32.mrf.mxu0
  %v54 = vadd.f32 %v20, %v53
  %v55 = vand.u32 %v27, 4294901760
  %v56 = vsub.f32 %v27, %v55
  %v57 = vand.u32 %v56, 4294901760
  %v58 = vsub.f32 %v56, %v57
  %v59 = vand.u32 %v58, 4294901760
  %60 = vmatmul.f32.gmra.mxu0 %v59
  %v61 = vpop.f32.mrf.mxu0
  %v62 = vadd.f32 %v20, %v61
  %63 = vdwg.mxu0
  %64 = vmatpush.msra.mxu0 0.0
  %65 = vmatpush.msra.mxu0 0.0
  %66 = vmatpush.msra.mxu0 0.0
  %67 = vmatpush.msra.mxu0 0.0
  %68 = vmatpush.msra.mxu0 0.0
  %69 = vmatpush.msra.mxu0 0.0
  %70 = vmatpush.msra.mxu0 0.0
  %71 = vmatpush.msra.mxu0 0.0
  %72 = vmatpush.msra.mxu0 0.0
  %73 = vmatpush.msra.mxu0 0.0
  %74 = vmatpush.msra.mxu0 0.0
  %75 = vmatpush.msra.mxu0 0.0
  %76 = vmatpush.msra.mxu0 0.0
  %77 = vmatpush.msra.mxu0 0.0
  %v78 = vand.u32 %v17, 4294901760
  %v79 = vsub.f32 %v17, %v78
  %v80 = vand.u32 %v79, 4294901760
  %v81 = vsub.f32 %v79, %v80
  %v82 = vand.u32 %v81, 4294901760
  %83 = vmatpush.msra.mxu0 %v82
  %v84 = vand.u32 %v16, 4294901760
  %v85 = vsub.f32 %v16, %v84
  %v86 = vand.u32 %v85, 4294901760
  %v87 = vsub.f32 %v85, %v86
  %v88 = vand.u32 %v87, 4294901760
  %89 = vmatpush.msra.mxu0 %v88
  %v90 = vand.u32 %v24, 4294901760
  %91 = vmatmul.f32.gmra.mxu0 %v90
  %v92 = vpop.f32.mrf.mxu0
  %v93 = vadd.f32 %v54, %v92
  %v94 = vand.u32 %v27, 4294901760
  %95 = vmatmul.f32.gmra.mxu0 %v94
  %v96 = vpop.f32.mrf.mxu0
  %v97 = vadd.f32 %v62, %v96
  %98 = vdwg.mxu0
  %99 = vmatpush.msra.mxu0 0.0
  %100 = vmatpush.msra.mxu0 0.0
  %101 = vmatpush.msra.mxu0 0.0
  %102 = vmatpush.msra.mxu0 0.0
  %103 = vmatpush.msra.mxu0 0.0
  %104 = vmatpush.msra.mxu0 0.0
  %105 = vmatpush.msra.mxu0 0.0
  %106 = vmatpush.msra.mxu0 0.0
  %107 = vmatpush.msra.mxu0 0.0
  %108 = vmatpush.msra.mxu0 0.0
  %109 = vmatpush.msra.mxu0 0.0
  %110 = vmatpush.msra.mxu0 0.0
  %111 = vmatpush.msra.mxu0 0.0
  %112 = vmatpush.msra.mxu0 0.0
  %v113 = vand.u32 %v17, 4294901760
  %v114 = vsub.f32 %v17, %v113
  %115 = vmatpush.msra.mxu0 %v114
  %v116 = vand.u32 %v16, 4294901760
  %v117 = vsub.f32 %v16, %v116
  %118 = vmatpush.msra.mxu0 %v117
  %v119 = vand.u32 %v24, 4294901760
  %v120 = vsub.f32 %v24, %v119
  %121 = vmatmul.f32.gmra.mxu0 %v120
  %v122 = vpop.f32.mrf.mxu0
  %v123 = vadd.f32 %v93, %v122
  %v124 = vand.u32 %v27, 4294901760
  %v125 = vsub.f32 %v27, %v124
  %126 = vmatmul.f32.gmra.mxu0 %v125
  %v127 = vpop.f32.mrf.mxu0
  %v128 = vadd.f32 %v97, %v127
  %129 = vdwg.mxu0
  %130 = vmatpush.msra.mxu0 0.0
  %131 = vmatpush.msra.mxu0 0.0
  %132 = vmatpush.msra.mxu0 0.0
  %133 = vmatpush.msra.mxu0 0.0
  %134 = vmatpush.msra.mxu0 0.0
  %135 = vmatpush.msra.mxu0 0.0
  %136 = vmatpush.msra.mxu0 0.0
  %137 = vmatpush.msra.mxu0 0.0
  %138 = vmatpush.msra.mxu0 0.0
  %139 = vmatpush.msra.mxu0 0.0
  %140 = vmatpush.msra.mxu0 0.0
  %141 = vmatpush.msra.mxu0 0.0
  %142 = vmatpush.msra.mxu0 0.0
  %143 = vmatpush.msra.mxu0 0.0
  %v144 = vand.u32 %v17, 4294901760
  %145 = vmatpush.msra.mxu0 %v144
  %v146 = vand.u32 %v16, 4294901760
  %147 = vmatpush.msra.mxu0 %v146
  %v148 = vand.u32 %v24, 4294901760
  %v149 = vsub.f32 %v24, %v148
  %v150 = vand.u32 %v149, 4294901760
  %151 = vmatmul.f32.gmra.mxu0 %v150
  %v152 = vpop.f32.mrf.mxu0
  %v153 = vadd.f32 %v123, %v152
  %v154 = vand.u32 %v27, 4294901760
  %v155 = vsub.f32 %v27, %v154
  %v156 = vand.u32 %v155, 4294901760
  %157 = vmatmul.f32.gmra.mxu0 %v156
  %v158 = vpop.f32.mrf.mxu0
  %v159 = vadd.f32 %v128, %v158
  %160 = vdwg.mxu0
  %161 = vmatpush.msra.mxu0 0.0
  %162 = vmatpush.msra.mxu0 0.0
  %163 = vmatpush.msra.mxu0 0.0
  %164 = vmatpush.msra.mxu0 0.0
  %165 = vmatpush.msra.mxu0 0.0
  %166 = vmatpush.msra.mxu0 0.0
  %167 = vmatpush.msra.mxu0 0.0
  %168 = vmatpush.msra.mxu0 0.0
  %169 = vmatpush.msra.mxu0 0.0
  %170 = vmatpush.msra.mxu0 0.0
  %171 = vmatpush.msra.mxu0 0.0
  %172 = vmatpush.msra.mxu0 0.0
  %173 = vmatpush.msra.mxu0 0.0
  %174 = vmatpush.msra.mxu0 0.0
  %v175 = vand.u32 %v17, 4294901760
  %v176 = vsub.f32 %v17, %v175
  %v177 = vand.u32 %v176, 4294901760
  %178 = vmatpush.msra.mxu0 %v177
  %v179 = vand.u32 %v16, 4294901760
  %v180 = vsub.f32 %v16, %v179
  %v181 = vand.u32 %v180, 4294901760
  %182 = vmatpush.msra.mxu0 %v181
  %v183 = vand.u32 %v24, 4294901760
  %184 = vmatmul.f32.gmra.mxu0 %v183
  %v185 = vpop.f32.mrf.mxu0
  %v186 = vadd.f32 %v153, %v185
  %v187 = vand.u32 %v27, 4294901760
  %188 = vmatmul.f32.gmra.mxu0 %v187
  %v189 = vpop.f32.mrf.mxu0
  %v190 = vadd.f32 %v159, %v189
  %191 = vdwg.mxu0
  %192 = vmatpush.msra.mxu0 0.0
  %193 = vmatpush.msra.mxu0 0.0
  %194 = vmatpush.msra.mxu0 0.0
  %195 = vmatpush.msra.mxu0 0.0
  %196 = vmatpush.msra.mxu0 0.0
  %197 = vmatpush.msra.mxu0 0.0
  %198 = vmatpush.msra.mxu0 0.0
  %199 = vmatpush.msra.mxu0 0.0
  %200 = vmatpush.msra.mxu0 0.0
  %201 = vmatpush.msra.mxu0 0.0
  %202 = vmatpush.msra.mxu0 0.0
  %203 = vmatpush.msra.mxu0 0.0
  %204 = vmatpush.msra.mxu0 0.0
  %205 = vmatpush.msra.mxu0 0.0
  %v206 = vand.u32 %v17, 4294901760
  %207 = vmatpush.msra.mxu0 %v206
  %v208 = vand.u32 %v16, 4294901760
  %209 = vmatpush.msra.mxu0 %v208
  %v210 = vand.u32 %v24, 4294901760
  %211 = vmatmul.f32.gmra.mxu0 %v210
  %v212 = vpop.f32.mrf.mxu0
  %v213 = vadd.f32 %v186, %v212
  %v214 = vand.u32 %v27, 4294901760
  %215 = vmatmul.f32.gmra.mxu0 %v214
  %v216 = vpop.f32.mrf.mxu0
  %v217 = vadd.f32 %v190, %v216
  %218 = vdwg.mxu0
  %vm219 = vcmask 64512
  %220 = vst.msk [vmem:[%s3] sm:$0xff] %vm219, %v213
  %221 = vst.msk [vmem:[%s3 + $0x8] sm:$0xff] %vm219, %v217
  // Predicated region
  $region14: #{tpu_custom_call.1} parent=0 // pred_check
    _
  $region15: #{tpu_custom_call.1} parent=0 // pred_check_branch
    %223 = sbr.rel (0) target = $region17
  $region16: #{tpu_custom_call.1} parent=0 // pred_region
    _
  $region17: #{tpu_custom_call.1} parent=0 // pred_fallthru
    _
  // Predicated region
  $region18: #{tpu_custom_call.1} parent=0 // pred_check
    _
  $region19: #{tpu_custom_call.1} parent=0 // pred_check_branch
    %225 = sbr.rel (0) target = $region21
  $region20: #{tpu_custom_call.1} parent=0 // pred_region
    _
  $region21: #{tpu_custom_call.1} parent=0 // pred_fallthru
    _

</llo_original>
